<compile_context>
chip_gen: v5e
topology: v5e:2x2
jax: 0.10.0
libtpu: 0.0.40
codegen_flags: <defaults>
</compile_context>

<pallas_src>
import functools
import math

import jax
import jax.numpy as jnp
from jax.experimental import pallas as pl
from jax.experimental.pallas import tpu as pltpu

EPS = 1e-5


def _round_up(a, b):
    return ((a + b - 1) // b) * b


def _tpu_caps():
    """Physical VMEM bytes per core, with a conservative fallback."""
    vmem = 128 * 1024 * 1024
    try:
        info = pltpu.get_tpu_info()
        vmem = int(getattr(info, "vmem_capacity_bytes", vmem))
    except Exception:
        pass
    return vmem


_VMEM_CAP_BYTES = _tpu_caps()
# v7x exposes 64 MiB VMEM per TensorCore and has 2 TensorCores per chip.
_NUM_TC = 2 if _VMEM_CAP_BYTES <= 64 * 1024 * 1024 else 1
# Per-tile working-set budget: double-buffered in/out tiles + in-kernel f32 temporaries.
_TILE_BUDGET_BYTES = max(8 * 1024 * 1024, min(_VMEM_CAP_BYTES // 5, 24 * 1024 * 1024))
_VMEM_LIMIT_BYTES = min(_VMEM_CAP_BYTES // 2, 64 * 1024 * 1024)
# Keep enough grid steps to feed every TensorCore (v7x: 2) and the software pipeline.
_MIN_GRID_STEPS = 8 if _NUM_TC >= 2 else 4


def _make_kernel(C: int, g: int):
    """LayerNorm over a (TR, g*C) tile; g independent C-wide segments per lane-row."""
    inv_c = 1.0 / float(C)

    def kernel(x_ref, mT_ref, m_ref, w_ref, o_ref):
        x = x_ref[...]                                   # (TR, gc), input dtype
        xf = x.astype(jnp.float32)

        if g == 1:
            # Channels already lane-aligned (or unpackable): plain cross-lane (XLU) reduce.
            mu = jnp.mean(xf, axis=-1, keepdims=True)
            xc = xf - mu
            var = jnp.mean(xc * xc, axis=-1, keepdims=True)     # centered, biased
            scale = jax.lax.rsqrt(var + EPS) * w_ref[...]       # (1, C) weight row
            o_ref[...] = (xf * scale).astype(o_ref.dtype)
            return

        # ---- segmented statistics on the MXU (vector-extended slot; VPU stays ~free) ----
        # mT: (gc, g) one-hot in x.dtype; m: (g, gc) one-hot f32; w: (1, gc) tiled weight f32.
        # bf16 inputs are fed to the MXU directly; accumulation is f32.
        mu = jnp.dot(x, mT_ref[...], preferred_element_type=jnp.float32) * inv_c       # (TR, g)
        mu_b = jnp.dot(mu, m_ref[...], preferred_element_type=jnp.float32)             # (TR, gc)
        xc = xf - mu_b                                                                  # centered
        xc2 = xc * xc
        var = jnp.dot(xc2.astype(x.dtype), mT_ref[...],
                      preferred_element_type=jnp.float32) * inv_c                       # (TR, g)
        var_b = jnp.dot(var, m_ref[...], preferred_element_type=jnp.float32)            # (TR, gc)
        scale = jax.lax.rsqrt(var_b + EPS) * w_ref[...]   # rsqrt -> EUP slot; weight exact f32
        o_ref[...] = (xf * scale).astype(o_ref.dtype)

    return kernel


@functools.partial(jax.jit, static_argnames=("row_tile",))
def biasfree_layernorm(x, weight, row_tile=2048):
    """x: (..., C); weight: (C,). Returns same shape/dtype as x."""
    orig_shape = x.shape
    C = int(orig_shape[-1])
    rows = 1
    for d in orig_shape[:-1]:
        rows *= int(d)
    rows = max(rows, 1)

    # ---- lane packing: g logical rows per 128-lane row (free row-major reshape) ----
    g = 128 // math.gcd(C, 128)          # power of two
    if g > 16:                           # MXU segmented reduce keeps g<=16 cheap
        g = 1
    while g > 1 and rows % g != 0:
        g //= 2
    if (g * C) % 128 != 0:               # packing would not reach lane density
        g = 1
    gc = g * C
    rp = rows // g                       # packed row count

    x2 = x.reshape(rp, gc)               # free, row-major view

    # Exact one-hot segment matrices (lane l belongs to segment l // C) + tiled weight.
    lane_seg = jax.lax.broadcasted_iota(jnp.int32, (g, gc), 1) // C
    row_seg = jax.lax.broadcasted_iota(jnp.int32, (g, gc), 0)
    masks = (lane_seg == row_seg).astype(jnp.float32)            # (g, gc)  MXU broadcast operand
    masks_t = masks.T.astype(x.dtype)                            # (gc, g)  MXU reduce operand
    w_full = jnp.tile(weight.astype(jnp.float32).reshape(C), g).reshape(1, gc)

    # ---- row tile: as large as the (generation-aware) VMEM budget allows ----
    itemsize = jnp.dtype(x.dtype).itemsize
    # double-buffered in + out tiles plus ~4 live full-width f32 temporaries in-kernel
    bytes_per_row = gc * (4 * itemsize + 16)
    tr = max(8, min(int(row_tile), _round_up(rp, 8)))
    while tr > 8 and tr * bytes_per_row > _TILE_BUDGET_BYTES:
        tr //= 2
    while tr > 64 and pl.cdiv(rp, tr) < _MIN_GRID_STEPS:
        tr //= 2
    tr = max(8, (tr // 8) * 8)

    grid = (pl.cdiv(rp, tr),)            # ragged rows: boundary blocks are masked

    out = pl.pallas_call(
        _make_kernel(C, g),
        out_shape=jax.ShapeDtypeStruct((rp, gc), x.dtype),
        grid_spec=pltpu.PrefetchScalarGridSpec(
            num_scalar_prefetch=0,
            grid=grid,
            in_specs=[
                # NOTE(perf, v7x): if profiling shows exposed DMA after the MXU offload,
                # add pipeline_mode=pl.Buffered(3) to this x spec.
                pl.BlockSpec((tr, gc), lambda i: (i, 0)),
                pl.BlockSpec((gc, g), lambda i: (0, 0)),
                pl.BlockSpec((g, gc), lambda i: (0, 0)),
                pl.BlockSpec((1, gc), lambda i: (0, 0)),
            ],
            out_specs=pl.BlockSpec((tr, gc), lambda i: (i, 0)),
        ),
        compiler_params=pltpu.CompilerParams(
            dimension_semantics=("parallel",),
            vmem_limit_bytes=_VMEM_LIMIT_BYTES,
        ),
    )(x2, masks_t, masks, w_full)
    return out.reshape(orig_shape)


def _reference(x, weight):
    x32 = x.astype(jnp.float32)
    var = jnp.var(x32, axis=-1, keepdims=True)  # biased (ddof=0) == unbiased=False
    return (x32 / jnp.sqrt(var + EPS) * weight.astype(jnp.float32)).astype(x.dtype)


if __name__ == "__main__":
    key = jax.random.PRNGKey(0)
    k1, k2, k3, k4, k5 = jax.random.split(key, 5)

    # f32 self-test tolerance: segmented statistics run on the MXU; headroom covers a
    # possible reduced-precision f32 matmul path (typical observed error is ~1e-6).
    TOL = 5e-3

    # 1) packed MXU path (C=32 -> g=4, 128 lanes); nonzero mean exercises the centering.
    x1 = jax.random.normal(k1, (2, 64, 32), dtype=jnp.float32) * 2.0 + 3.0
    w1 = jnp.ones((32,), jnp.float32)  # matches nn.Parameter(torch.ones(C))
    o1 = jax.block_until_ready(biasfree_layernorm(x1, w1))
    r1 = _reference(x1, w1)
    assert o1.shape == x1.shape and o1.dtype == x1.dtype
    assert jnp.allclose(o1, r1, atol=TOL, rtol=TOL), "mismatch (test 1)"

    # 2) ragged grid: 36 packed rows with a 16-row tile -> partial last block.
    x2 = jax.random.normal(k2, (2, 72, 32), dtype=jnp.float32)
    w2 = jax.random.normal(k3, (32,), dtype=jnp.float32) * 0.1 + 1.0
    o2 = jax.block_until_ready(biasfree_layernorm(x2, w2, row_tile=16))
    r2 = _reference(x2, w2)
    assert jnp.allclose(o2, r2, atol=TOL, rtol=TOL), "mismatch (test 2)"

    # 3) bf16 I/O (halved HBM traffic), C=96 -> g=4, 384 lanes; bf16 fed straight to the MXU.
    x3 = jax.random.normal(k4, (2, 16, 16, 96), dtype=jnp.float32).astype(jnp.bfloat16)
    w3 = jnp.ones((96,), jnp.bfloat16)
    o3 = jax.block_until_ready(biasfree_layernorm(x3, w3))
    r3 = _reference(x3, w3)
    assert o3.dtype == jnp.bfloat16
    assert jnp.allclose(o3.astype(jnp.float32), r3.astype(jnp.float32),
                        atol=2e-2, rtol=2e-2), "mismatch (test 3)"

    # 4) odd channel count (C=40 -> g=16, 640 lanes): stays lane-dense, no g=1 fallback.
    x4 = jax.random.normal(k5, (2, 8, 16, 40), dtype=jnp.float32)
    w4 = jnp.linspace(0.5, 1.5, 40, dtype=jnp.float32)
    o4 = jax.block_until_ready(biasfree_layernorm(x4, w4))
    r4 = _reference(x4, w4)
    assert jnp.allclose(o4, r4, atol=TOL, rtol=TOL), "mismatch (test 4)"

    # 5) already lane-aligned channels (C=384, IIformer latent dim) -> g=1 XLU path.
    x5 = jax.random.normal(k1, (1, 8, 8, 384), dtype=jnp.float32)
    w5 = jnp.ones((384,), jnp.float32)
    o5 = jax.block_until_ready(biasfree_layernorm(x5, w5))
    r5 = _reference(x5, w5)
    assert jnp.allclose(o5, r5, atol=1e-5, rtol=1e-5), "mismatch (test 5)"

    print("KERNEL_OK")
</pallas_src>

<mosaic_0001>
module attributes {stable_mosaic.version = 11 : i64} {
  func.func @kernel(%arg0: i32, %arg1: memref<32x128xf32, #tpu.memory_space<vmem>>, %arg2: memref<128x4xf32, #tpu.memory_space<vmem>>, %arg3: memref<4x128xf32, #tpu.memory_space<vmem>>, %arg4: memref<1x128xf32, #tpu.memory_space<vmem>>, %arg5: memref<32x128xf32, #tpu.memory_space<vmem>>) attributes {dimension_semantics = [#tpu.dimension_semantics<parallel>], iteration_bounds = array<i64: 1>, scalar_prefetch = 0 : i64, scratch_operands = 0 : i64, tpu.core_type = #tpu.core_type<tc>, window_params = [{transform_indices = @transform_0, window_bounds = array<i64: 32, 128>}, {pipeline_mode = #tpu.pipeline_mode<synchronous>, transform_indices = @transform_1, window_bounds = array<i64: 128, 4>}, {pipeline_mode = #tpu.pipeline_mode<synchronous>, transform_indices = @transform_2, window_bounds = array<i64: 4, 128>}, {pipeline_mode = #tpu.pipeline_mode<synchronous>, transform_indices = @transform_3, window_bounds = array<i64: 1, 128>}, {transform_indices = @transform_4, window_bounds = array<i64: 32, 128>}]} {
    %c0 = arith.constant 0 : index
    %c0_0 = arith.constant 0 : index
    %0 = vector.load %arg1[%c0, %c0_0] : memref<32x128xf32, #tpu.memory_space<vmem>>, vector<32x128xf32>
    %c0_1 = arith.constant 0 : index
    %c0_2 = arith.constant 0 : index
    %1 = vector.load %arg2[%c0_1, %c0_2] : memref<128x4xf32, #tpu.memory_space<vmem>>, vector<128x4xf32>
    %cst = arith.constant dense<0.000000e+00> : vector<32x4xf32>
    %2 = tpu.matmul %0, %1, %cst {dimension_numbers = #tpu.dot_dimension_numbers<[1], [0], [0], [1], [0, 0, 1, 1], [], []>} : vector<32x128xf32>, vector<128x4xf32>, vector<32x4xf32> -> vector<32x4xf32>
    %cst_3 = arith.constant 3.125000e-02 : f32
    %3 = vector.broadcast %cst_3 : f32 to vector<32x4xf32>
    %4 = arith.mulf %2, %3 : vector<32x4xf32>
    %c0_4 = arith.constant 0 : index
    %c0_5 = arith.constant 0 : index
    %5 = vector.load %arg3[%c0_4, %c0_5] : memref<4x128xf32, #tpu.memory_space<vmem>>, vector<4x128xf32>
    %cst_6 = arith.constant dense<0.000000e+00> : vector<32x128xf32>
    %6 = tpu.matmul %4, %5, %cst_6 {dimension_numbers = #tpu.dot_dimension_numbers<[1], [0], [0], [1], [0, 0, 1, 1], [], []>} : vector<32x4xf32>, vector<4x128xf32>, vector<32x128xf32> -> vector<32x128xf32>
    %7 = arith.subf %0, %6 : vector<32x128xf32>
    %8 = arith.mulf %7, %7 : vector<32x128xf32>
    %c0_7 = arith.constant 0 : index
    %c0_8 = arith.constant 0 : index
    %9 = vector.load %arg2[%c0_7, %c0_8] : memref<128x4xf32, #tpu.memory_space<vmem>>, vector<128x4xf32>
    %cst_9 = arith.constant dense<0.000000e+00> : vector<32x4xf32>
    %10 = tpu.matmul %8, %9, %cst_9 {dimension_numbers = #tpu.dot_dimension_numbers<[1], [0], [0], [1], [0, 0, 1, 1], [], []>} : vector<32x128xf32>, vector<128x4xf32>, vector<32x4xf32> -> vector<32x4xf32>
    %cst_10 = arith.constant 3.125000e-02 : f32
    %11 = vector.broadcast %cst_10 : f32 to vector<32x4xf32>
    %12 = arith.mulf %10, %11 : vector<32x4xf32>
    %c0_11 = arith.constant 0 : index
    %c0_12 = arith.constant 0 : index
    %13 = vector.load %arg3[%c0_11, %c0_12] : memref<4x128xf32, #tpu.memory_space<vmem>>, vector<4x128xf32>
    %cst_13 = arith.constant dense<0.000000e+00> : vector<32x128xf32>
    %14 = tpu.matmul %12, %13, %cst_13 {dimension_numbers = #tpu.dot_dimension_numbers<[1], [0], [0], [1], [0, 0, 1, 1], [], []>} : vector<32x4xf32>, vector<4x128xf32>, vector<32x128xf32> -> vector<32x128xf32>
    %cst_14 = arith.constant 9.99999974E-6 : f32
    %15 = vector.broadcast %cst_14 : f32 to vector<32x128xf32>
    %16 = arith.addf %14, %15 : vector<32x128xf32>
    %17 = math.rsqrt %16 : vector<32x128xf32>
    %c0_15 = arith.constant 0 : index
    %c0_16 = arith.constant 0 : index
    %18 = vector.load %arg4[%c0_15, %c0_16] : memref<1x128xf32, #tpu.memory_space<vmem>>, vector<1x128xf32>
    %19 = vector.broadcast %18 : vector<1x128xf32> to vector<32x128xf32>
    %20 = arith.mulf %17, %19 : vector<32x128xf32>
    %21 = arith.mulf %0, %20 : vector<32x128xf32>
    %c0_17 = arith.constant 0 : index
    %c0_18 = arith.constant 0 : index
    %22 = vector.load %arg5[%c0_17, %c0_18] : memref<32x128xf32, #tpu.memory_space<vmem>>, vector<32x128xf32>
    tpu.vector_store %arg5[%c0_17, %c0_18], %21 {strides = array<i32>} : memref<32x128xf32, #tpu.memory_space<vmem>>, vector<32x128xf32>,
    return
  }
  func.func @transform_0(%arg0: i32) -> (i32, i32) {
    %c0_i32 = arith.constant 0 : i32
    %c0_i32_0 = arith.constant 0 : i32
    return %arg0, %c0_i32 : i32, i32
  }
  func.func @transform_1(%arg0: i32) -> (i32, i32) {
    %c0_i32 = arith.constant 0 : i32
    %c0_i32_0 = arith.constant 0 : i32
    %c0_i32_1 = arith.constant 0 : i32
    return %c0_i32, %c0_i32_0 : i32, i32
  }
  func.func @transform_2(%arg0: i32) -> (i32, i32) {
    %c0_i32 = arith.constant 0 : i32
    %c0_i32_0 = arith.constant 0 : i32
    %c0_i32_1 = arith.constant 0 : i32
    return %c0_i32, %c0_i32_0 : i32, i32
  }
  func.func @transform_3(%arg0: i32) -> (i32, i32) {
    %c0_i32 = arith.constant 0 : i32
    %c0_i32_0 = arith.constant 0 : i32
    %c0_i32_1 = arith.constant 0 : i32
    return %c0_i32, %c0_i32_0 : i32, i32
  }
  func.func @transform_4(%arg0: i32) -> (i32, i32) {
    %c0_i32 = arith.constant 0 : i32
    %c0_i32_0 = arith.constant 0 : i32
    return %arg0, %c0_i32 : i32, i32
  }
}

</mosaic_0001>

<llo_original>
// kernel: tile.8
$region0: #{tile.8}
  #allocation0 [shape = 's32[1]{0}', space=sflag, size = 0x4, scoped, tag = 'scoped memory for tile.8']
  %s0 = inlined_call_operand.vmem [shape: f32[32], index: 0, kind: input, shape index: {}]
  %s1 = inlined_call_operand.vmem [shape: f32[4,32], index: 1, kind: output, shape index: {}]
  // Predicated region
  $region2: #{tile.8} parent=0 // pred_check
    _
  $region3: #{tile.8} parent=0 // pred_check_branch
    %3 = sbr.rel (0) target = $region5
  $region4: #{tile.8} parent=0 // pred_region
    _
  $region5: #{tile.8} parent=0 // pred_fallthru
    _
  %v4 = vld [vmem:[%s0] ss:$0 sm:$0xff]
  %5 = vst [vmem:[%s1] sm:$0xf] %v4

// kernel: tile.9
$region0: #{tile.9}
  %s0 = inlined_call_operand.vmem [shape: f32[4,32], index: 0, kind: input, shape index: {}]
  %s1 = inlined_call_operand.vmem [shape: f32[1,128], index: 1, kind: output, shape index: {}]
  $region1: #{tile.9} parent=0
    #allocation0 [shape = 'u8[4096]{0}', space=vmem, size = 0x1000, scoped, tag = 'scoped mem for output reshape']
    #allocation1 [shape = 'u8[4096]{0}', space=vmem, size = 0x1000, scoped, tag = 'scoped mem for input reshape']
    %s3 = ssub.s32 16, 1
    %v4 = vld [vmem:[%s0] sm:%s3]
    %5 = vst [vmem:[#allocation1] sm:%s3] %v4
    %v6 = vld [vmem:[#allocation1] sm:$0x1]
    %vm7 = vcmask 261120
    %8 = vst.msk [vmem:[#allocation0] sm:$0x1] %vm7, %v6
    %s9 = scalar_lea.vmem [#allocation1], 3
    %v10 = vld [vmem:[%s9] sm:$0x1]
    %11 = vrot.lane.b32.xlu0 %v10, 96
    %v12 = vpop.permute.xlu0 %11
    %vm13 = vcmask 1048320
    %14 = vst.msk [vmem:[#allocation0] sm:$0x1] %vm13, %v12
    %s15 = scalar_lea.vmem [#allocation1], 2
    %v16 = vld [vmem:[%s15] sm:$0x1]
    %17 = vrot.lane.b32.xlu0 %v16, 64
    %v18 = vpop.permute.xlu0 %17
    %vm19 = vcmask 785920
    %20 = vst.msk [vmem:[#allocation0] sm:$0x1] %vm19, %v18
    %s21 = scalar_lea.vmem [#allocation1], 1
    %v22 = vld [vmem:[%s21] sm:$0x1]
    %23 = vrot.lane.b32.xlu0 %v22, 32
    %v24 = vpop.permute.xlu0 %23
    %vm25 = vcmask 523520
    %26 = vst.msk [vmem:[#allocation0] sm:$0x1] %vm25, %v24
    %s28 = ssub.s32 2, 1
    %v29 = vld [vmem:[#allocation0] sm:%s28]
    %s31 = ssub.s32 2, 1
    %32 = vst [vmem:[%s1] sm:%s31] %v29

// kernel: biasfree_layernorm.1
$region0: #{biasfree_layernorm.1}
  #allocation0 [shape = 'u32[]', space=smem, size = 0x4, offset = 0x4, fixed_abs, tag = 'smem constant byte address 0x4 - core index']
  #allocation1 [shape = 'u32[72,128]{1,0:T(1,128)}', space=vmem, size = 0x9000, scoped, tag = 'internal scratch']
  %s0 = inlined_call_operand.vmem [shape: f32[32,128], index: 0, kind: input, shape index: {}]
  %s1 = inlined_call_operand.vmem [shape: f32[128,4], index: 1, kind: input, shape index: {}]
  %s2 = inlined_call_operand.vmem [shape: f32[4,128], index: 2, kind: input, shape index: {}]
  %s3 = inlined_call_operand.vmem [shape: f32[1,128], index: 3, kind: input, shape index: {}]
  %s4 = inlined_call_operand.vmem [shape: f32[32,128], index: 4, kind: output, shape index: {}]
  %s5 = sld [smem:[#allocation0]]
  $region26: #{biasfree_layernorm.1} parent=0
    _
  %s7 = ssub.s32 1, %s5
  %s8 = scalar_select 0, %s7, %s5
  // Predicated region
  $region2: #{biasfree_layernorm.1} parent=0 // pred_check
    _
  $region3: #{biasfree_layernorm.1} parent=0 // pred_check_branch
    %10 = sbr.rel (0) target = $region5
  $region4: #{biasfree_layernorm.1} parent=0 // pred_region
    _
  $region5: #{biasfree_layernorm.1} parent=0 // pred_fallthru
    _
  // Predicated region
  $region6: #{biasfree_layernorm.1} parent=0 // pred_check
    _
  $region7: #{biasfree_layernorm.1} parent=0 // pred_check_branch
    %12 = sbr.rel (0) target = $region9
  $region8: #{biasfree_layernorm.1} parent=0 // pred_region
    _
  $region9: #{biasfree_layernorm.1} parent=0 // pred_fallthru
    _
  // Predicated region
  $region10: #{biasfree_layernorm.1} parent=0 // pred_check
    _
  $region11: #{biasfree_layernorm.1} parent=0 // pred_check_branch
    %14 = sbr.rel (0) target = $region13
  $region12: #{biasfree_layernorm.1} parent=0 // pred_region
    _
  $region13: #{biasfree_layernorm.1} parent=0 // pred_fallthru
    _
  // Predicated region
  $region14: #{biasfree_layernorm.1} parent=0 // pred_check
    _
  $region15: #{biasfree_layernorm.1} parent=0 // pred_check_branch
    %16 = sbr.rel (0) target = $region17
  $region16: #{biasfree_layernorm.1} parent=0 // pred_region
    _
  $region17: #{biasfree_layernorm.1} parent=0 // pred_fallthru
    _
  %v17 = vld [vmem:[%s0] sm:$0xff]
  %v18 = vld [vmem:[%s0 + $0x8] sm:$0xff]
  %v19 = vld [vmem:[%s0 + $0x10] sm:$0xff]
  %v20 = vld [vmem:[%s0 + $0x18] sm:$0xff]
  %v21 = vld [vmem:[%s1] sm:$0xff]
  %v22 = vld [vmem:[%s1 + $0x8] sm:$0xff]
  %v23 = vld [vmem:[%s1 + $0x10] sm:$0xff]
  %v24 = vld [vmem:[%s1 + $0x18] sm:$0xff]
  %v25 = vld [vmem:[%s1 + $0x20] sm:$0xff]
  %v26 = vld [vmem:[%s1 + $0x28] sm:$0xff]
  %v27 = vld [vmem:[%s1 + $0x30] sm:$0xff]
  %v28 = vld [vmem:[%s1 + $0x38] sm:$0xff]
  %v29 = vld [vmem:[%s1 + $0x40] sm:$0xff]
  %v30 = vld [vmem:[%s1 + $0x48] sm:$0xff]
  %v31 = vld [vmem:[%s1 + $0x50] sm:$0xff]
  %v32 = vld [vmem:[%s1 + $0x58] sm:$0xff]
  %v33 = vld [vmem:[%s1 + $0x60] sm:$0xff]
  %v34 = vld [vmem:[%s1 + $0x68] sm:$0xff]
  %v35 = vld [vmem:[%s1 + $0x70] sm:$0xff]
  %v36 = vld [vmem:[%s1 + $0x78] sm:$0xff]
  %37 = vmatpush.msra.mxu0 %v36
  %38 = vmatpush.msra.mxu0 %v35
  %39 = vmatpush.msra.mxu0 %v34
  %40 = vmatpush.msra.mxu0 %v33
  %41 = vmatpush.msra.mxu0 %v32
  %42 = vmatpush.msra.mxu0 %v31
  %43 = vmatpush.msra.mxu0 %v30
  %44 = vmatpush.msra.mxu0 %v29
  %45 = vmatpush.msra.mxu0 %v28
  %46 = vmatpush.msra.mxu0 %v27
  %47 = vmatpush.msra.mxu0 %v26
  %48 = vmatpush.msra.mxu0 %v25
  %49 = vmatpush.msra.mxu0 %v24
  %50 = vmatpush.msra.mxu0 %v23
  %51 = vmatpush.msra.mxu0 %v22
  %52 = vmatpush.msra.mxu0 %v21
  %53 = vmatmul.f32.gmra.mxu0 %v17
  %v54 = vpop.f32.mrf.mxu0
  %v55 = vadd.f32 0.0, %v54
  %56 = vmatmul.f32.gmra.mxu0 %v18
  %v57 = vpop.f32.mrf.mxu0
  %v58 = vadd.f32 0.0, %v57
  %59 = vmatmul.f32.gmra.mxu0 %v19
  %v60 = vpop.f32.mrf.mxu0
  %v61 = vadd.f32 0.0, %v60
  %62 = vmatmul.f32.gmra.mxu0 %v20
  %v63 = vpop.f32.mrf.mxu0
  %v64 = vadd.f32 0.0, %v63
  %65 = vdwg.mxu0
  %v66 = vmul.f32 %v55, 0.03125
  %v67 = vmul.f32 %v58, 0.03125
  %v68 = vmul.f32 %v61, 0.03125
  %v69 = vmul.f32 %v64, 0.03125
  %v70 = vld [vmem:[%s2] sm:$0xf]
  %vm71 = vcmask 31744
  %v73 = vsel %vm71, %v66, 0
  %v76 = vsel %vm71, %v67, 0
  %v79 = vsel %vm71, %v68, 0
  %v82 = vsel %vm71, %v69, 0
  %vm84 = vcmask 1043456
  %v86 = vsel %vm84, %v70, 0
  %88 = vmatpush.msra.mxu0 0.0
  %89 = vmatpush.msra.mxu0 0.0
  %90 = vmatpush.msra.mxu0 0.0
  %91 = vmatpush.msra.mxu0 0.0
  %92 = vmatpush.msra.mxu0 0.0
  %93 = vmatpush.msra.mxu0 0.0
  %94 = vmatpush.msra.mxu0 0.0
  %95 = vmatpush.msra.mxu0 0.0
  %96 = vmatpush.msra.mxu0 0.0
  %97 = vmatpush.msra.mxu0 0.0
  %98 = vmatpush.msra.mxu0 0.0
  %99 = vmatpush.msra.mxu0 0.0
  %100 = vmatpush.msra.mxu0 0.0
  %101 = vmatpush.msra.mxu0 0.0
  %102 = vmatpush.msra.mxu0 0.0
  %103 = vmatpush.msra.mxu0 %v86
  %104 = vmatmul.f32.gmra.mxu0 %v73
  %v105 = vpop.f32.mrf.mxu0
  %v106 = vadd.f32 0.0, %v105
  %107 = vmatmul.f32.gmra.mxu0 %v76
  %v108 = vpop.f32.mrf.mxu0
  %v109 = vadd.f32 0.0, %v108
  %110 = vmatmul.f32.gmra.mxu0 %v79
  %v111 = vpop.f32.mrf.mxu0
  %v112 = vadd.f32 0.0, %v111
  %113 = vmatmul.f32.gmra.mxu0 %v82
  %v114 = vpop.f32.mrf.mxu0
  %v115 = vadd.f32 0.0, %v114
  %116 = vdwg.mxu0
  %v117 = vsub.f32 %v17, %v106
  %v118 = vsub.f32 %v18, %v109
  %v119 = vsub.f32 %v19, %v112
  %v120 = vsub.f32 %v20, %v115
  %v121 = vmul.f32 %v117, %v117
  %v122 = vmul.f32 %v118, %v118
  %v123 = vmul.f32 %v119, %v119
  %v124 = vmul.f32 %v120, %v120
  %125 = vmatpush.msra.mxu0 %v36
  %126 = vmatpush.msra.mxu0 %v35
  %127 = vmatpush.msra.mxu0 %v34
  %128 = vmatpush.msra.mxu0 %v33
  %129 = vmatpush.msra.mxu0 %v32
  %130 = vmatpush.msra.mxu0 %v31
  %131 = vmatpush.msra.mxu0 %v30
  %132 = vmatpush.msra.mxu0 %v29
  %133 = vmatpush.msra.mxu0 %v28
  %134 = vmatpush.msra.mxu0 %v27
  %135 = vmatpush.msra.mxu0 %v26
  %136 = vmatpush.msra.mxu0 %v25
  %137 = vmatpush.msra.mxu0 %v24
  %138 = vmatpush.msra.mxu0 %v23
  %139 = vmatpush.msra.mxu0 %v22
  %140 = vmatpush.msra.mxu0 %v21
  %141 = vmatmul.f32.gmra.mxu0 %v121
  %v142 = vpop.f32.mrf.mxu0
  %v143 = vadd.f32 0.0, %v142
  %144 = vmatmul.f32.gmra.mxu0 %v122
  %v145 = vpop.f32.mrf.mxu0
  %v146 = vadd.f32 0.0, %v145
  %147 = vmatmul.f32.gmra.mxu0 %v123
  %v148 = vpop.f32.mrf.mxu0
  %v149 = vadd.f32 0.0, %v148
  %150 = vmatmul.f32.gmra.mxu0 %v124
  %v151 = vpop.f32.mrf.mxu0
  %v152 = vadd.f32 0.0, %v151
  %153 = vdwg.mxu0
  %v154 = vmul.f32 %v143, 0.03125
  %v155 = vmul.f32 %v146, 0.03125
  %v156 = vmul.f32 %v149, 0.03125
  %v157 = vmul.f32 %v152, 0.03125
  %v159 = vsel %vm71, %v154, 0
  %v162 = vsel %vm71, %v155, 0
  %v165 = vsel %vm71, %v156, 0
  %v168 = vsel %vm71, %v157, 0
  %170 = vmatpush.msra.mxu0 0.0
  %171 = vmatpush.msra.mxu0 0.0
  %172 = vmatpush.msra.mxu0 0.0
  %173 = vmatpush.msra.mxu0 0.0
  %174 = vmatpush.msra.mxu0 0.0
  %175 = vmatpush.msra.mxu0 0.0
  %176 = vmatpush.msra.mxu0 0.0
  %177 = vmatpush.msra.mxu0 0.0
  %178 = vmatpush.msra.mxu0 0.0
  %179 = vmatpush.msra.mxu0 0.0
  %180 = vmatpush.msra.mxu0 0.0
  %181 = vmatpush.msra.mxu0 0.0
  %182 = vmatpush.msra.mxu0 0.0
  %183 = vmatpush.msra.mxu0 0.0
  %184 = vmatpush.msra.mxu0 0.0
  %185 = vmatpush.msra.mxu0 %v86
  %186 = vmatmul.f32.gmra.mxu0 %v159
  %v187 = vpop.f32.mrf.mxu0
  %v188 = vadd.f32 1e-05, %v187
  %189 = vmatmul.f32.gmra.mxu0 %v162
  %v190 = vpop.f32.mrf.mxu0
  %v191 = vadd.f32 1e-05, %v190
  %192 = vmatmul.f32.gmra.mxu0 %v165
  %v193 = vpop.f32.mrf.mxu0
  %v194 = vadd.f32 1e-05, %v193
  %195 = vmatmul.f32.gmra.mxu0 %v168
  %v196 = vpop.f32.mrf.mxu0
  %v197 = vadd.f32 1e-05, %v196
  %198 = vdwg.mxu0
  %v199 = vrsqrt.pop %v188
  %v200 = vmul.f32 %v199, %v188
  %v201 = vmul.f32 %v200, %v199
  %v202 = vmul.f32 0.5, %v201
  %v203 = vsub.f32 1.5, %v202
  %v204 = vmul.f32 %v199, %v203
  %vm205 = vweird.f32 %v188
  %vm206 = vweird.f32 %v199
  %vm207 = vmor %vm205, %vm206
  %v208 = vsel %vm207, %v199, %v204
  %v209 = vrsqrt.pop %v191
  %v210 = vmul.f32 %v209, %v191
  %v211 = vmul.f32 %v210, %v209
  %v212 = vmul.f32 0.5, %v211
  %v213 = vsub.f32 1.5, %v212
  %v214 = vmul.f32 %v209, %v213
  %vm215 = vweird.f32 %v191
  %vm216 = vweird.f32 %v209
  %vm217 = vmor %vm215, %vm216
  %v218 = vsel %vm217, %v209, %v214
  %v219 = vrsqrt.pop %v194
  %v220 = vmul.f32 %v219, %v194
  %v221 = vmul.f32 %v220, %v219
  %v222 = vmul.f32 0.5, %v221
  %v223 = vsub.f32 1.5, %v222
  %v224 = vmul.f32 %v219, %v223
  %vm225 = vweird.f32 %v194
  %vm226 = vweird.f32 %v219
  %vm227 = vmor %vm225, %vm226
  %v228 = vsel %vm227, %v219, %v224
  %v229 = vrsqrt.pop %v197
  %v230 = vmul.f32 %v229, %v197
  %v231 = vmul.f32 %v230, %v229
  %v232 = vmul.f32 0.5, %v231
  %v233 = vsub.f32 1.5, %v232
  %v234 = vmul.f32 %v229, %v233
  %vm235 = vweird.f32 %v197
  %vm236 = vweird.f32 %v229
  %vm237 = vmor %vm235, %vm236
  %v238 = vsel %vm237, %v229, %v234
  %v239 = vld [vmem:[%s3] sm:$0x1]
  %v241 = vperm.slane %v239, 0
  %v243 = vmul.f32 %v208, %v241
  %v244 = vmul.f32 %v218, %v241
  %v245 = vmul.f32 %v228, %v241
  %v246 = vmul.f32 %v238, %v241
  %v247 = vmul.f32 %v17, %v243
  %v248 = vmul.f32 %v18, %v244
  %v249 = vmul.f32 %v19, %v245
  %v250 = vmul.f32 %v20, %v246
  %251 = vst [vmem:[%s4] sm:$0xff] %v247
  %252 = vst [vmem:[%s4 + $0x8] sm:$0xff] %v248
  %253 = vst [vmem:[%s4 + $0x10] sm:$0xff] %v249
  %254 = vst [vmem:[%s4 + $0x18] sm:$0xff] %v250
  // Predicated region
  $region18: #{biasfree_layernorm.1} parent=0 // pred_check
    _
  $region19: #{biasfree_layernorm.1} parent=0 // pred_check_branch
    %256 = sbr.rel (0) target = $region21
  $region20: #{biasfree_layernorm.1} parent=0 // pred_region
    _
  $region21: #{biasfree_layernorm.1} parent=0 // pred_fallthru
    _
  // Predicated region
  $region22: #{biasfree_layernorm.1} parent=0 // pred_check
    _
  $region23: #{biasfree_layernorm.1} parent=0 // pred_check_branch
    %258 = sbr.rel (0) target = $region25
  $region24: #{biasfree_layernorm.1} parent=0 // pred_region
    _
  $region25: #{biasfree_layernorm.1} parent=0 // pred_fallthru
    _

</llo_original>
